<compile_context>
chip_gen: v6e
topology: v6e:2x2x1
jax: 0.10.0
libtpu: 0.0.40
codegen_flags: <defaults>
</compile_context>

<pallas_src>
import functools

import jax
import jax.numpy as jnp
from jax.experimental import pallas as pl
from jax.experimental.pallas import tpu as pltpu

DIM = 32          # input feature dim ("dim" in the PyTorch module)
H1 = 100
H2 = 50
OUT = 19
OUT_PAD = 32      # lane-padded output width actually written to HBM
LANE = 128
N_LAYERS = 5
BN_EPS = 1e-5
LEAKY_SLOPE = 0.1

_DIMS_IN = (DIM, H1, H1, H2, H2)
_DIMS_OUT = (H1, H1, H2, H2, OUT)


def _round_up(n, m):
    return ((n + m - 1) // m) * m


def _cdiv(a, b):
    return -(-a // b)


def mlp_kernel(x_ref, w_ref, b_ref, out_ref, *, bf16_elem):
    # x_ref  : (TM, DIM)        bf16 -- one batch tile
    # w_ref  : (5, 128, 128)    bf16 -- BN-folded weights, zero-padded, resident
    # b_ref  : (5, 1, 128)      f32  -- BN-folded biases, zero-padded, resident
    # out_ref: (TM, OUT_PAD)    f32  -- columns >= OUT are exact zeros
    h = x_ref[...]                                   # (TM, DIM) bf16
    for l in range(N_LAYERS):
        w = w_ref[l]                                 # (128, 128) bf16
        if l == 0:
            w = w[:DIM, :]                           # only real input rows
        if l == N_LAYERS - 1:
            # Final layer: emit only the 32 useful lanes (Dropout eval = id).
            out_ref[...] = (
                jnp.dot(h, w[:, :OUT_PAD], preferred_element_type=jnp.float32)
                + b_ref[l][:, :OUT_PAD])
        else:
            acc = jnp.dot(h, w, preferred_element_type=jnp.float32) + b_ref[l]
            if bf16_elem:
                # v6e/v7x: bf16 VALU is native; halve intermediate traffic.
                acc = acc.astype(jnp.bfloat16)
                h = jnp.maximum(acc, LEAKY_SLOPE * acc)          # LeakyReLU
            else:
                # v5e and older: keep elementwise math in f32, cast at MXU input.
                h = jnp.maximum(acc, LEAKY_SLOPE * acc).astype(jnp.bfloat16)


def make_raw_params(key):
    """Raw per-layer params: (gamma, beta, running_mean, running_var, W[in,out], b)."""
    raw = []
    keys = jax.random.split(key, 6 * N_LAYERS)
    ki = 0
    for din, dout in zip(_DIMS_IN, _DIMS_OUT):
        gamma = 1.0 + 0.05 * jax.random.normal(keys[ki], (din,), jnp.float32); ki += 1
        beta = 0.05 * jax.random.normal(keys[ki], (din,), jnp.float32); ki += 1
        run_mean = 0.1 * jax.random.normal(keys[ki], (din,), jnp.float32); ki += 1
        run_var = 1.0 + 0.1 * jnp.abs(
            jax.random.normal(keys[ki], (din,), jnp.float32)); ki += 1
        w = 0.1 * jax.random.normal(keys[ki], (din, dout), jnp.float32); ki += 1
        b = 0.1 * jax.random.normal(keys[ki], (dout,), jnp.float32); ki += 1
        raw.append((gamma, beta, run_mean, run_var, w, b))
    return raw


def fold_params(raw):
    """Fold eval-mode BN into the following Linear and pad to (128,128) lane tiles."""
    w_pads, b_pads = [], []
    for (gamma, beta, mean, var, w, b), din, dout in zip(raw, _DIMS_IN, _DIMS_OUT):
        scale = gamma / jnp.sqrt(var + BN_EPS)
        shift = beta - mean * scale
        w_f = scale[:, None] * w                 # diag(scale) @ W      -> [din, dout]
        b_f = shift @ w + b                      # shift @ W + b        -> [dout]
        w_pad = jnp.zeros((LANE, LANE), jnp.float32).at[:din, :dout].set(w_f)
        b_pad = jnp.zeros((1, LANE), jnp.float32).at[0, :dout].set(b_f)
        w_pads.append(w_pad)
        b_pads.append(b_pad)
    w_all = jnp.stack(w_pads).astype(jnp.bfloat16)   # (5, 128, 128) bf16
    b_all = jnp.stack(b_pads)                        # (5, 1, 128)   f32
    return w_all, b_all


def _tpu_flags():
    """(bf16_elementwise_ok, has_two_tensorcores) from the local device kind."""
    try:
        kind = jax.devices()[0].device_kind.lower()
    except Exception:  # pragma: no cover - defensive default
        return True, False
    is_v5_or_older = any(t in kind for t in ("v2", "v3", "v4", "v5"))
    is_v7 = "7" in kind
    return (not is_v5_or_older), is_v7


@functools.partial(jax.jit, static_argnames=("tm", "bf16_elem"))
def _net_forward_impl(x, w_all, b_all, tm, bf16_elem):
    B = x.shape[0]
    b_pad = _round_up(B, tm)
    x = x.astype(jnp.bfloat16)                       # halve input DMA
    if b_pad != B:
        x = jnp.pad(x, ((0, b_pad - B), (0, 0)))
    grid = (b_pad // tm,)
    out = pl.pallas_call(
        functools.partial(mlp_kernel, bf16_elem=bf16_elem),
        out_shape=jax.ShapeDtypeStruct((b_pad, OUT_PAD), jnp.float32),
        grid=grid,
        in_specs=[
            pl.BlockSpec((tm, DIM), lambda i: (i, 0)),                  # batch-tiled x
            pl.BlockSpec((N_LAYERS, LANE, LANE), lambda i: (0, 0, 0)),  # resident weights
            pl.BlockSpec((N_LAYERS, 1, LANE), lambda i: (0, 0, 0)),     # resident biases
        ],
        out_specs=pl.BlockSpec((tm, OUT_PAD), lambda i: (i, 0)),        # narrow output
        compiler_params=pltpu.CompilerParams(
            dimension_semantics=("parallel",)),
    )(x, w_all, b_all)
    return out[:B, :OUT]


def net_forward(x, w_all, b_all, *, tm_max=2048):
    B = x.shape[0]
    bf16_elem, two_tc = _tpu_flags()
    # Balanced tiles: never pad b_pad to ~2x B when B is just over a boundary.
    n_tiles = max(1, _cdiv(B, tm_max))
    if two_tc and n_tiles < 2 and B > 8:
        n_tiles = 2          # v7x: >=2 grid steps so both TensorCores are used
    tm = _round_up(_cdiv(B, n_tiles), 8)
    return _net_forward_impl(x, w_all, b_all, tm, bf16_elem)


def reference_forward(x, raw):
    """Pure-JAX f32 reference of the original eval-mode BN->Linear->LeakyReLU net."""
    h = x.astype(jnp.float32)
    for i, (gamma, beta, mean, var, w, b) in enumerate(raw):
        h = (h - mean) * (gamma / jnp.sqrt(var + BN_EPS)) + beta
        h = h @ w + b
        if i < N_LAYERS - 1:
            h = jnp.where(h >= 0, h, LEAKY_SLOPE * h)
    return h


def reference_forward_folded(x, w_all, b_all):
    """f32 reference using the exact bf16-rounded folded/padded weights + bf16 input."""
    h = x.astype(jnp.bfloat16).astype(jnp.float32)   # match kernel's bf16 input
    w = w_all.astype(jnp.float32)
    b = b_all[:, 0, :]
    for l in range(N_LAYERS):
        wl = w[l, :DIM, :] if l == 0 else w[l]
        h = h @ wl + b[l]
        if l < N_LAYERS - 1:
            h = jnp.maximum(h, LEAKY_SLOPE * h)
    return h[:, :OUT]


if __name__ == "__main__":
    key = jax.random.PRNGKey(0)
    kx, kp = jax.random.split(key)
    B = 16
    x = jax.random.normal(kx, (B, DIM), jnp.float32)

    raw = make_raw_params(kp)
    w_all, b_all = fold_params(raw)

    out = net_forward(x, w_all, b_all)
    out = jax.block_until_ready(out)
    assert out.shape == (B, OUT), out.shape

    # Tight check: same bf16-rounded weights/input; only in-kernel bf16
    # activation rounding differs (intentional precision choice).
    ref_folded = reference_forward_folded(x, w_all, b_all)
    assert jnp.allclose(out, ref_folded, atol=2e-2, rtol=2e-2), float(
        jnp.max(jnp.abs(out - ref_folded)))

    # Semantic check vs the original eval-mode module (covers BN fold + bf16 quant).
    ref = reference_forward(x, raw)
    assert jnp.allclose(out, ref, atol=5e-2, rtol=5e-2), float(
        jnp.max(jnp.abs(out - ref)))

    # TODO(synk): training-mode BatchNorm (batch statistics) and stochastic Dropout
    # are not implemented; this kernel covers the eval-mode forward pass only.
    print("KERNEL_OK")
</pallas_src>

<mosaic_0001>
module attributes {stable_mosaic.version = 11 : i64} {
  func.func @mlp_kernel(%arg0: i32, %arg1: memref<16x32xbf16, #tpu.memory_space<vmem>>, %arg2: memref<5x128x128xbf16, #tpu.memory_space<vmem>>, %arg3: memref<5x1x128xf32, #tpu.memory_space<vmem>>, %arg4: memref<16x32xf32, #tpu.memory_space<vmem>>) attributes {dimension_semantics = [#tpu.dimension_semantics<parallel>], iteration_bounds = array<i64: 1>, scalar_prefetch = 0 : i64, scratch_operands = 0 : i64, tpu.core_type = #tpu.core_type<tc>, window_params = [{transform_indices = @transform_0, window_bounds = array<i64: 16, 32>}, {pipeline_mode = #tpu.pipeline_mode<synchronous>, transform_indices = @transform_1, window_bounds = array<i64: 5, 128, 128>}, {pipeline_mode = #tpu.pipeline_mode<synchronous>, transform_indices = @transform_2, window_bounds = array<i64: 5, 1, 128>}, {transform_indices = @transform_3, window_bounds = array<i64: 16, 32>}]} {
    %c0 = arith.constant 0 : index
    %c0_0 = arith.constant 0 : index
    %0 = vector.load %arg1[%c0, %c0_0] : memref<16x32xbf16, #tpu.memory_space<vmem>>, vector<16x32xbf16>
    %c0_1 = arith.constant 0 : index
    %c0_2 = arith.constant 0 : index
    %c0_3 = arith.constant 0 : index
    %1 = vector.load %arg2[%c0_1, %c0_2, %c0_3] : memref<5x128x128xbf16, #tpu.memory_space<vmem>>, vector<1x128x128xbf16>
    %2 = vector.shape_cast %1 : vector<1x128x128xbf16> to vector<128x128xbf16>
    %3 = vector.extract_strided_slice %2 {offsets = [0, 0], sizes = [32, 128], strides = [1, 1]} : vector<128x128xbf16> to vector<32x128xbf16>
    %cst = arith.constant dense<0.000000e+00> : vector<16x128xf32>
    %4 = tpu.matmul %0, %3, %cst {dimension_numbers = #tpu.dot_dimension_numbers<[1], [0], [0], [1], [0, 0, 1, 1], [], []>} : vector<16x32xbf16>, vector<32x128xbf16>, vector<16x128xf32> -> vector<16x128xf32>
    %c0_4 = arith.constant 0 : index
    %c0_5 = arith.constant 0 : index
    %c0_6 = arith.constant 0 : index
    %5 = vector.load %arg3[%c0_4, %c0_5, %c0_6] : memref<5x1x128xf32, #tpu.memory_space<vmem>>, vector<1x1x128xf32>
    %6 = vector.shape_cast %5 : vector<1x1x128xf32> to vector<1x128xf32>
    %7 = vector.broadcast %6 : vector<1x128xf32> to vector<16x128xf32>
    %8 = arith.addf %4, %7 : vector<16x128xf32>
    %9 = arith.truncf %8 : vector<16x128xf32> to vector<16x128xbf16>
    %cst_7 = arith.constant 1.000980e-01 : bf16
    %10 = vector.broadcast %cst_7 : bf16 to vector<16x128xbf16>
    %11 = arith.mulf %10, %9 : vector<16x128xbf16>
    %12 = arith.maximumf %9, %11 : vector<16x128xbf16>
    %c1 = arith.constant 1 : index
    %c0_8 = arith.constant 0 : index
    %c0_9 = arith.constant 0 : index
    %13 = vector.load %arg2[%c1, %c0_8, %c0_9] : memref<5x128x128xbf16, #tpu.memory_space<vmem>>, vector<1x128x128xbf16>
    %14 = vector.shape_cast %13 : vector<1x128x128xbf16> to vector<128x128xbf16>
    %cst_10 = arith.constant dense<0.000000e+00> : vector<16x128xf32>
    %15 = tpu.matmul %12, %14, %cst_10 {dimension_numbers = #tpu.dot_dimension_numbers<[1], [0], [0], [1], [0, 0, 1, 1], [], []>} : vector<16x128xbf16>, vector<128x128xbf16>, vector<16x128xf32> -> vector<16x128xf32>
    %c1_11 = arith.constant 1 : index
    %c0_12 = arith.constant 0 : index
    %c0_13 = arith.constant 0 : index
    %16 = vector.load %arg3[%c1_11, %c0_12, %c0_13] : memref<5x1x128xf32, #tpu.memory_space<vmem>>, vector<1x1x128xf32>
    %17 = vector.shape_cast %16 : vector<1x1x128xf32> to vector<1x128xf32>
    %18 = vector.broadcast %17 : vector<1x128xf32> to vector<16x128xf32>
    %19 = arith.addf %15, %18 : vector<16x128xf32>
    %20 = arith.truncf %19 : vector<16x128xf32> to vector<16x128xbf16>
    %cst_14 = arith.constant 1.000980e-01 : bf16
    %21 = vector.broadcast %cst_14 : bf16 to vector<16x128xbf16>
    %22 = arith.mulf %21, %20 : vector<16x128xbf16>
    %23 = arith.maximumf %20, %22 : vector<16x128xbf16>
    %c2 = arith.constant 2 : index
    %c0_15 = arith.constant 0 : index
    %c0_16 = arith.constant 0 : index
    %24 = vector.load %arg2[%c2, %c0_15, %c0_16] : memref<5x128x128xbf16, #tpu.memory_space<vmem>>, vector<1x128x128xbf16>
    %25 = vector.shape_cast %24 : vector<1x128x128xbf16> to vector<128x128xbf16>
    %cst_17 = arith.constant dense<0.000000e+00> : vector<16x128xf32>
    %26 = tpu.matmul %23, %25, %cst_17 {dimension_numbers = #tpu.dot_dimension_numbers<[1], [0], [0], [1], [0, 0, 1, 1], [], []>} : vector<16x128xbf16>, vector<128x128xbf16>, vector<16x128xf32> -> vector<16x128xf32>
    %c2_18 = arith.constant 2 : index
    %c0_19 = arith.constant 0 : index
    %c0_20 = arith.constant 0 : index
    %27 = vector.load %arg3[%c2_18, %c0_19, %c0_20] : memref<5x1x128xf32, #tpu.memory_space<vmem>>, vector<1x1x128xf32>
    %28 = vector.shape_cast %27 : vector<1x1x128xf32> to vector<1x128xf32>
    %29 = vector.broadcast %28 : vector<1x128xf32> to vector<16x128xf32>
    %30 = arith.addf %26, %29 : vector<16x128xf32>
    %31 = arith.truncf %30 : vector<16x128xf32> to vector<16x128xbf16>
    %cst_21 = arith.constant 1.000980e-01 : bf16
    %32 = vector.broadcast %cst_21 : bf16 to vector<16x128xbf16>
    %33 = arith.mulf %32, %31 : vector<16x128xbf16>
    %34 = arith.maximumf %31, %33 : vector<16x128xbf16>
    %c3 = arith.constant 3 : index
    %c0_22 = arith.constant 0 : index
    %c0_23 = arith.constant 0 : index
    %35 = vector.load %arg2[%c3, %c0_22, %c0_23] : memref<5x128x128xbf16, #tpu.memory_space<vmem>>, vector<1x128x128xbf16>
    %36 = vector.shape_cast %35 : vector<1x128x128xbf16> to vector<128x128xbf16>
    %cst_24 = arith.constant dense<0.000000e+00> : vector<16x128xf32>
    %37 = tpu.matmul %34, %36, %cst_24 {dimension_numbers = #tpu.dot_dimension_numbers<[1], [0], [0], [1], [0, 0, 1, 1], [], []>} : vector<16x128xbf16>, vector<128x128xbf16>, vector<16x128xf32> -> vector<16x128xf32>
    %c3_25 = arith.constant 3 : index
    %c0_26 = arith.constant 0 : index
    %c0_27 = arith.constant 0 : index
    %38 = vector.load %arg3[%c3_25, %c0_26, %c0_27] : memref<5x1x128xf32, #tpu.memory_space<vmem>>, vector<1x1x128xf32>
    %39 = vector.shape_cast %38 : vector<1x1x128xf32> to vector<1x128xf32>
    %40 = vector.broadcast %39 : vector<1x128xf32> to vector<16x128xf32>
    %41 = arith.addf %37, %40 : vector<16x128xf32>
    %42 = arith.truncf %41 : vector<16x128xf32> to vector<16x128xbf16>
    %cst_28 = arith.constant 1.000980e-01 : bf16
    %43 = vector.broadcast %cst_28 : bf16 to vector<16x128xbf16>
    %44 = arith.mulf %43, %42 : vector<16x128xbf16>
    %45 = arith.maximumf %42, %44 : vector<16x128xbf16>
    %c4 = arith.constant 4 : index
    %c0_29 = arith.constant 0 : index
    %c0_30 = arith.constant 0 : index
    %46 = vector.load %arg2[%c4, %c0_29, %c0_30] : memref<5x128x128xbf16, #tpu.memory_space<vmem>>, vector<1x128x128xbf16>
    %47 = vector.shape_cast %46 : vector<1x128x128xbf16> to vector<128x128xbf16>
    %48 = vector.extract_strided_slice %47 {offsets = [0, 0], sizes = [128, 32], strides = [1, 1]} : vector<128x128xbf16> to vector<128x32xbf16>
    %cst_31 = arith.constant dense<0.000000e+00> : vector<16x32xf32>
    %49 = tpu.matmul %45, %48, %cst_31 {dimension_numbers = #tpu.dot_dimension_numbers<[1], [0], [0], [1], [0, 0, 1, 1], [], []>} : vector<16x128xbf16>, vector<128x32xbf16>, vector<16x32xf32> -> vector<16x32xf32>
    %c4_32 = arith.constant 4 : index
    %c0_33 = arith.constant 0 : index
    %c0_34 = arith.constant 0 : index
    %50 = vector.load %arg3[%c4_32, %c0_33, %c0_34] : memref<5x1x128xf32, #tpu.memory_space<vmem>>, vector<1x1x128xf32>
    %51 = vector.shape_cast %50 : vector<1x1x128xf32> to vector<1x128xf32>
    %52 = vector.extract_strided_slice %51 {offsets = [0, 0], sizes = [1, 32], strides = [1, 1]} : vector<1x128xf32> to vector<1x32xf32>
    %53 = vector.broadcast %52 : vector<1x32xf32> to vector<16x32xf32>
    %54 = arith.addf %49, %53 : vector<16x32xf32>
    %c0_35 = arith.constant 0 : index
    %c0_36 = arith.constant 0 : index
    %55 = vector.load %arg4[%c0_35, %c0_36] : memref<16x32xf32, #tpu.memory_space<vmem>>, vector<16x32xf32>
    tpu.vector_store %arg4[%c0_35, %c0_36], %54 {strides = array<i32>} : memref<16x32xf32, #tpu.memory_space<vmem>>, vector<16x32xf32>,
    return
  }
  func.func @transform_0(%arg0: i32) -> (i32, i32) {
    %c0_i32 = arith.constant 0 : i32
    %c0_i32_0 = arith.constant 0 : i32
    return %arg0, %c0_i32 : i32, i32
  }
  func.func @transform_1(%arg0: i32) -> (i32, i32, i32) {
    %c0_i32 = arith.constant 0 : i32
    %c0_i32_0 = arith.constant 0 : i32
    %c0_i32_1 = arith.constant 0 : i32
    %c0_i32_2 = arith.constant 0 : i32
    return %c0_i32, %c0_i32_0, %c0_i32_1 : i32, i32, i32
  }
  func.func @transform_2(%arg0: i32) -> (i32, i32, i32) {
    %c0_i32 = arith.constant 0 : i32
    %c0_i32_0 = arith.constant 0 : i32
    %c0_i32_1 = arith.constant 0 : i32
    %c0_i32_2 = arith.constant 0 : i32
    return %c0_i32, %c0_i32_0, %c0_i32_1 : i32, i32, i32
  }
  func.func @transform_3(%arg0: i32) -> (i32, i32) {
    %c0_i32 = arith.constant 0 : i32
    %c0_i32_0 = arith.constant 0 : i32
    return %arg0, %c0_i32 : i32, i32
  }
}

</mosaic_0001>

<llo_original>
// kernel: _net_forward_impl.1
$region0: #{_net_forward_impl.1}
  #allocation0 [shape = 'u32[]', space=smem, size = 0x4, offset = 0x4, fixed_abs, tag = 'smem constant byte address 0x4 - core index']
  #allocation1 [shape = 'u32[144,128]{1,0:T(1,128)}', space=vmem, size = 0x12000, scoped, tag = 'internal scratch']
  %s0 = inlined_call_operand.vmem [shape: bf16[16,32], index: 0, kind: input, shape index: {}]
  %s1 = inlined_call_operand.hbm [shape: bf16[5,128,128], index: 1, kind: input, shape index: {}]
  %s2 = inlined_call_operand.vmem [shape: f32[5,1,128], index: 2, kind: input, shape index: {}]
  %s3 = inlined_call_operand.hbm [shape: f32[16,32], index: 3, kind: output, shape index: {}]
  %s4 = sld [smem:[#allocation0]]
  $region26: #{_net_forward_impl.1} parent=0
    _
  %s6 = ssub.s32 1, %s4
  %s7 = scalar_select 0, %s6, %s4
  $region1: #{_net_forward_impl.1} parent=0
    #allocation2 [shape = 'u8[163840]{0}', space=vmem, size = 0x28000, scoped, tag = 'input window, operand 1, single buffered']
    #allocation3 [shape = 's32[1]{0}', space=sflag, size = 0x4, scoped, tag = 'scoped memory for _net_forward_impl.1']
    #allocation4 [shape = 's32[1]{0}', space=sflag, size = 0x4, scoped, tag = 'scoped memory for _net_forward_impl.1']
    #allocation5 [shape = 'u8[8192]{0}', space=vmem, size = 0x2000, scoped, tag = 'output window, operand 0, single buffered']
    %8 = vsyncpa [#allocation3], 0
    %9 = vsyncpa [#allocation4], 0
    // Predicated region
    $region2: #{_net_forward_impl.1} parent=1 // pred_check
      _
    $region3: #{_net_forward_impl.1} parent=1 // pred_check_branch
      %11 = sbr.rel (0) target = $region5
    $region4: #{_net_forward_impl.1} parent=1 // pred_region
      _
    $region5: #{_net_forward_impl.1} parent=1 // pred_fallthru
      _
    // Predicated region
    $region6: #{_net_forward_impl.1} parent=1 // pred_check
      _
    $region7: #{_net_forward_impl.1} parent=1 // pred_check_branch
      %13 = sbr.rel (0) target = $region9
    $region8: #{_net_forward_impl.1} parent=1 // pred_region
      %s15 = ssub.s32 5120, 5120
      %16 = vsyncadd [#allocation3], %s15
      %s17 = sshll.u32 [#allocation2], 4
      %s18 = int_to_ptr.vmem [resolvable:$true] %s17
      %23 = dma.hbm_to_vmem [thread:$0]  %s1, 5120, %s18, [#allocation3], 64, 64, 4
    $region9: #{_net_forward_impl.1} parent=1 // pred_fallthru
      _
    // Predicated region
    $region10: #{_net_forward_impl.1} parent=1 // pred_check
      _
    $region11: #{_net_forward_impl.1} parent=1 // pred_check_branch
      %25 = sbr.rel (0) target = $region13
    $region12: #{_net_forward_impl.1} parent=1 // pred_region
      _
    $region13: #{_net_forward_impl.1} parent=1 // pred_fallthru
      _
    // Predicated region
    $region14: #{_net_forward_impl.1} parent=1 // pred_check
      _
    $region15: #{_net_forward_impl.1} parent=1 // pred_check_branch
      %27 = sbr.rel (0) target = $region17
    $region16: #{_net_forward_impl.1} parent=1 // pred_region
      %28 = dma.done [#allocation3], 5120
    $region17: #{_net_forward_impl.1} parent=1 // pred_fallthru
      _
    %v31 = vld [vmem:[%s0] sm:$0xf]
    %v32 = vld [vmem:[%s0 + $0x4] sm:$0xf]
    %v33 = vld [vmem:[#allocation2] sm:$0xf]
    %v34 = vld [vmem:[#allocation2 + $0x4] sm:$0xf]
    %v35 = vld [vmem:[#allocation2 + $0x8] sm:$0xf]
    %v36 = vld [vmem:[#allocation2 + $0xc] sm:$0xf]
    %v37 = vld [vmem:[%s2] sm:$0x1]
    %v39 = vlaneseq
    %v40 = vshrl.u32 %v39, 7
    %v41 = vsub.s32 0, %v40
    %v42 = vrot.slane %v37, %v41
    %v46 = vunpack.c.l.b16 %v31
    %v47 = vunpack.c.l.b16 %v32
    %v48 = vpack.c.b16 %v47, %v46
    %v53 = vunpack.c.l.b16 %v33
    %v54 = vunpack.c.l.b16 %v34
    %v55 = vunpack.c.l.b16 %v35
    %v56 = vunpack.c.l.b16 %v36
    %v57 = vpack.c.b16 %v54, %v53
    %v58 = vpack.c.b16 %v56, %v55
    %vm61 = vcmask 261120
    %v63 = vsel %vm61, %v48, 0
    %65 = vmatprep.subr.bf16.mxu0 0
    %66 = vmatpush1.bf16.msra.mxu0 0
    %67 = vmatprep.subr.bf16.mxu0 0
    %68 = vmatpush1.bf16.msra.mxu0 0
    %69 = vmatprep.subr.bf16.mxu0 0
    %70 = vmatpush1.bf16.msra.mxu0 0
    %71 = vmatprep.subr.bf16.mxu0 0
    %72 = vmatpush1.bf16.msra.mxu0 0
    %73 = vmatprep.subr.bf16.mxu0 0
    %74 = vmatpush1.bf16.msra.mxu0 0
    %75 = vmatprep.subr.bf16.mxu0 0
    %76 = vmatpush1.bf16.msra.mxu0 0
    %77 = vmatprep.subr.bf16.mxu0 0
    %78 = vmatpush1.bf16.msra.mxu0 %v58
    %79 = vmatprep.subr.bf16.mxu0 0
    %80 = vmatpush1.bf16.msra.mxu0 %v57
    %81 = vmatprep.subr.bf16.mxu0 0
    %82 = vmatpush2.bf16.msra.mxu0 0
    %83 = vmatprep.subr.bf16.mxu0 0
    %84 = vmatpush2.bf16.msra.mxu0 0
    %85 = vmatprep.subr.bf16.mxu0 0
    %86 = vmatpush2.bf16.msra.mxu0 0
    %87 = vmatprep.subr.bf16.mxu0 0
    %88 = vmatpush2.bf16.msra.mxu0 0
    %89 = vmatprep.subr.bf16.mxu0 0
    %90 = vmatpush2.bf16.msra.mxu0 0
    %91 = vmatprep.subr.bf16.mxu0 0
    %92 = vmatpush2.bf16.msra.mxu0 0
    %93 = vmatprep.subr.bf16.mxu0 0
    %94 = vmatpush2.bf16.msra.mxu0 0
    %95 = vmatprep.subr.bf16.mxu0 0
    %96 = vmatpush2.bf16.msra.mxu0 0
    %97 = vmatprep.mubr.bf16.mxu0 0
    %98 = vmatmul.mubr.bf16.gmra.mxu0 %v63
    %v99 = vpop.f32.mrf.mxu0
    %v100 = vadd.f32 %v42, %v99
    %v101 = vpop.f32.mrf.mxu0
    %v102 = vpop.f32.mrf.mxu0
    %v103 = vadd.f32 %v42, %v102
    %v104 = vpop.f32.mrf.mxu0
    %105 = vdwg.mxu0
    %v106 = vpack.c.bf16 %v103, %v100
    %v107 = vmul.bf16 %v106, 1036860877
    %v108 = vmax.bf16 %v106, %v107
    %s109 = scalar_lea.vmem [#allocation2], 64
    %v110 = vld [vmem:[%s109] sm:$0xf]
    %v111 = vld [vmem:[%s109 + $0x4] sm:$0xf]
    %v112 = vld [vmem:[%s109 + $0x8] sm:$0xf]
    %v113 = vld [vmem:[%s109 + $0xc] sm:$0xf]
    %v114 = vld [vmem:[%s109 + $0x10] sm:$0xf]
    %v115 = vld [vmem:[%s109 + $0x14] sm:$0xf]
    %v116 = vld [vmem:[%s109 + $0x18] sm:$0xf]
    %v117 = vld [vmem:[%s109 + $0x1c] sm:$0xf]
    %v118 = vld [vmem:[%s109 + $0x20] sm:$0xf]
    %v119 = vld [vmem:[%s109 + $0x24] sm:$0xf]
    %v120 = vld [vmem:[%s109 + $0x28] sm:$0xf]
    %v121 = vld [vmem:[%s109 + $0x2c] sm:$0xf]
    %v122 = vld [vmem:[%s109 + $0x30] sm:$0xf]
    %v123 = vld [vmem:[%s109 + $0x34] sm:$0xf]
    %v124 = vld [vmem:[%s109 + $0x38] sm:$0xf]
    %v125 = vld [vmem:[%s109 + $0x3c] sm:$0xf]
    %s126 = scalar_lea.vmem %s2, 1
    %v127 = vld [vmem:[%s126] sm:$0x1]
    %v129 = vlaneseq
    %v130 = vshrl.u32 %v129, 7
    %v131 = vsub.s32 0, %v130
    %v132 = vrot.slane %v127, %v131
    %v150 = vunpack.c.l.b16 %v110
    %v151 = vunpack.c.l.b16 %v111
    %v152 = vunpack.c.l.b16 %v112
    %v153 = vunpack.c.l.b16 %v113
    %v154 = vunpack.c.l.b16 %v114
    %v155 = vunpack.c.l.b16 %v115
    %v156 = vunpack.c.l.b16 %v116
    %v157 = vunpack.c.l.b16 %v117
    %v158 = vunpack.c.l.b16 %v118
    %v159 = vunpack.c.l.b16 %v119
    %v160 = vunpack.c.l.b16 %v120
    %v161 = vunpack.c.l.b16 %v121
    %v162 = vunpack.c.l.b16 %v122
    %v163 = vunpack.c.l.b16 %v123
    %v164 = vunpack.c.l.b16 %v124
    %v165 = vunpack.c.l.b16 %v125
    %v166 = vpack.c.b16 %v151, %v150
    %v167 = vpack.c.b16 %v153, %v152
    %v168 = vpack.c.b16 %v155, %v154
    %v169 = vpack.c.b16 %v157, %v156
    %v170 = vpack.c.b16 %v159, %v158
    %v171 = vpack.c.b16 %v161, %v160
    %v172 = vpack.c.b16 %v163, %v162
    %v173 = vpack.c.b16 %v165, %v164
    %182 = vmatprep.subr.bf16.mxu0 0
    %183 = vmatpush1.bf16.msra.mxu0 %v173
    %184 = vmatprep.subr.bf16.mxu0 0
    %185 = vmatpush1.bf16.msra.mxu0 %v172
    %186 = vmatprep.subr.bf16.mxu0 0
    %187 = vmatpush1.bf16.msra.mxu0 %v171
    %188 = vmatprep.subr.bf16.mxu0 0
    %189 = vmatpush1.bf16.msra.mxu0 %v170
    %190 = vmatprep.subr.bf16.mxu0 0
    %191 = vmatpush1.bf16.msra.mxu0 %v169
    %192 = vmatprep.subr.bf16.mxu0 0
    %193 = vmatpush1.bf16.msra.mxu0 %v168
    %194 = vmatprep.subr.bf16.mxu0 0
    %195 = vmatpush1.bf16.msra.mxu0 %v167
    %196 = vmatprep.subr.bf16.mxu0 0
    %197 = vmatpush1.bf16.msra.mxu0 %v166
    %198 = vmatprep.subr.bf16.mxu0 0
    %199 = vmatpush2.bf16.msra.mxu0 0
    %200 = vmatprep.subr.bf16.mxu0 0
    %201 = vmatpush2.bf16.msra.mxu0 0
    %202 = vmatprep.subr.bf16.mxu0 0
    %203 = vmatpush2.bf16.msra.mxu0 0
    %204 = vmatprep.subr.bf16.mxu0 0
    %205 = vmatpush2.bf16.msra.mxu0 0
    %206 = vmatprep.subr.bf16.mxu0 0
    %207 = vmatpush2.bf16.msra.mxu0 0
    %208 = vmatprep.subr.bf16.mxu0 0
    %209 = vmatpush2.bf16.msra.mxu0 0
    %210 = vmatprep.subr.bf16.mxu0 0
    %211 = vmatpush2.bf16.msra.mxu0 0
    %212 = vmatprep.subr.bf16.mxu0 0
    %213 = vmatpush2.bf16.msra.mxu0 0
    %214 = vmatprep.mubr.bf16.mxu0 0
    %215 = vmatmul.mubr.bf16.gmra.mxu0 %v108
    %v216 = vpop.f32.mrf.mxu0
    %v217 = vadd.f32 %v132, %v216
    %v218 = vpop.f32.mrf.mxu0
    %v219 = vpop.f32.mrf.mxu0
    %v220 = vadd.f32 %v132, %v219
    %v221 = vpop.f32.mrf.mxu0
    %222 = vdwg.mxu0
    %v223 = vpack.c.bf16 %v220, %v217
    %v224 = vmul.bf16 %v223, 1036860877
    %v225 = vmax.bf16 %v223, %v224
    %s226 = scalar_lea.vmem [#allocation2], 128
    %v227 = vld [vmem:[%s226] sm:$0xf]
    %v228 = vld [vmem:[%s226 + $0x4] sm:$0xf]
    %v229 = vld [vmem:[%s226 + $0x8] sm:$0xf]
    %v230 = vld [vmem:[%s226 + $0xc] sm:$0xf]
    %v231 = vld [vmem:[%s226 + $0x10] sm:$0xf]
    %v232 = vld [vmem:[%s226 + $0x14] sm:$0xf]
    %v233 = vld [vmem:[%s226 + $0x18] sm:$0xf]
    %v234 = vld [vmem:[%s226 + $0x1c] sm:$0xf]
    %v235 = vld [vmem:[%s226 + $0x20] sm:$0xf]
    %v236 = vld [vmem:[%s226 + $0x24] sm:$0xf]
    %v237 = vld [vmem:[%s226 + $0x28] sm:$0xf]
    %v238 = vld [vmem:[%s226 + $0x2c] sm:$0xf]
    %v239 = vld [vmem:[%s226 + $0x30] sm:$0xf]
    %v240 = vld [vmem:[%s226 + $0x34] sm:$0xf]
    %v241 = vld [vmem:[%s226 + $0x38] sm:$0xf]
    %v242 = vld [vmem:[%s226 + $0x3c] sm:$0xf]
    %s243 = scalar_lea.vmem %s2, 2
    %v244 = vld [vmem:[%s243] sm:$0x1]
    %v246 = vlaneseq
    %v247 = vshrl.u32 %v246, 7
    %v248 = vsub.s32 0, %v247
    %v249 = vrot.slane %v244, %v248
    %v267 = vunpack.c.l.b16 %v227
    %v268 = vunpack.c.l.b16 %v228
    %v269 = vunpack.c.l.b16 %v229
    %v270 = vunpack.c.l.b16 %v230
    %v271 = vunpack.c.l.b16 %v231
    %v272 = vunpack.c.l.b16 %v232
    %v273 = vunpack.c.l.b16 %v233
    %v274 = vunpack.c.l.b16 %v234
    %v275 = vunpack.c.l.b16 %v235
    %v276 = vunpack.c.l.b16 %v236
    %v277 = vunpack.c.l.b16 %v237
    %v278 = vunpack.c.l.b16 %v238
    %v279 = vunpack.c.l.b16 %v239
    %v280 = vunpack.c.l.b16 %v240
    %v281 = vunpack.c.l.b16 %v241
    %v282 = vunpack.c.l.b16 %v242
    %v283 = vpack.c.b16 %v268, %v267
    %v284 = vpack.c.b16 %v270, %v269
    %v285 = vpack.c.b16 %v272, %v271
    %v286 = vpack.c.b16 %v274, %v273
    %v287 = vpack.c.b16 %v276, %v275
    %v288 = vpack.c.b16 %v278, %v277
    %v289 = vpack.c.b16 %v280, %v279
    %v290 = vpack.c.b16 %v282, %v281
    %299 = vmatprep.subr.bf16.mxu0 0
    %300 = vmatpush1.bf16.msra.mxu0 %v290
    %301 = vmatprep.subr.bf16.mxu0 0
    %302 = vmatpush1.bf16.msra.mxu0 %v289
    %303 = vmatprep.subr.bf16.mxu0 0
    %304 = vmatpush1.bf16.msra.mxu0 %v288
    %305 = vmatprep.subr.bf16.mxu0 0
    %306 = vmatpush1.bf16.msra.mxu0 %v287
    %307 = vmatprep.subr.bf16.mxu0 0
    %308 = vmatpush1.bf16.msra.mxu0 %v286
    %309 = vmatprep.subr.bf16.mxu0 0
    %310 = vmatpush1.bf16.msra.mxu0 %v285
    %311 = vmatprep.subr.bf16.mxu0 0
    %312 = vmatpush1.bf16.msra.mxu0 %v284
    %313 = vmatprep.subr.bf16.mxu0 0
    %314 = vmatpush1.bf16.msra.mxu0 %v283
    %315 = vmatprep.subr.bf16.mxu0 0
    %316 = vmatpush2.bf16.msra.mxu0 0
    %317 = vmatprep.subr.bf16.mxu0 0
    %318 = vmatpush2.bf16.msra.mxu0 0
    %319 = vmatprep.subr.bf16.mxu0 0
    %320 = vmatpush2.bf16.msra.mxu0 0
    %321 = vmatprep.subr.bf16.mxu0 0
    %322 = vmatpush2.bf16.msra.mxu0 0
    %323 = vmatprep.subr.bf16.mxu0 0
    %324 = vmatpush2.bf16.msra.mxu0 0
    %325 = vmatprep.subr.bf16.mxu0 0
    %326 = vmatpush2.bf16.msra.mxu0 0
    %327 = vmatprep.subr.bf16.mxu0 0
    %328 = vmatpush2.bf16.msra.mxu0 0
    %329 = vmatprep.subr.bf16.mxu0 0
    %330 = vmatpush2.bf16.msra.mxu0 0
    %331 = vmatprep.mubr.bf16.mxu0 0
    %332 = vmatmul.mubr.bf16.gmra.mxu0 %v225
    %v333 = vpop.f32.mrf.mxu0
    %v334 = vadd.f32 %v249, %v333
    %v335 = vpop.f32.mrf.mxu0
    %v336 = vpop.f32.mrf.mxu0
    %v337 = vadd.f32 %v249, %v336
    %v338 = vpop.f32.mrf.mxu0
    %339 = vdwg.mxu0
    %v340 = vpack.c.bf16 %v337, %v334
    %v341 = vmul.bf16 %v340, 1036860877
    %v342 = vmax.bf16 %v340, %v341
    %s343 = scalar_lea.vmem [#allocation2], 192
    %v344 = vld [vmem:[%s343] sm:$0xf]
    %v345 = vld [vmem:[%s343 + $0x4] sm:$0xf]
    %v346 = vld [vmem:[%s343 + $0x8] sm:$0xf]
    %v347 = vld [vmem:[%s343 + $0xc] sm:$0xf]
    %v348 = vld [vmem:[%s343 + $0x10] sm:$0xf]
    %v349 = vld [vmem:[%s343 + $0x14] sm:$0xf]
    %v350 = vld [vmem:[%s343 + $0x18] sm:$0xf]
    %v351 = vld [vmem:[%s343 + $0x1c] sm:$0xf]
    %v352 = vld [vmem:[%s343 + $0x20] sm:$0xf]
    %v353 = vld [vmem:[%s343 + $0x24] sm:$0xf]
    %v354 = vld [vmem:[%s343 + $0x28] sm:$0xf]
    %v355 = vld [vmem:[%s343 + $0x2c] sm:$0xf]
    %v356 = vld [vmem:[%s343 + $0x30] sm:$0xf]
    %v357 = vld [vmem:[%s343 + $0x34] sm:$0xf]
    %v358 = vld [vmem:[%s343 + $0x38] sm:$0xf]
    %v359 = vld [vmem:[%s343 + $0x3c] sm:$0xf]
    %s360 = scalar_lea.vmem %s2, 3
    %v361 = vld [vmem:[%s360] sm:$0x1]
    %v363 = vlaneseq
    %v364 = vshrl.u32 %v363, 7
    %v365 = vsub.s32 0, %v364
    %v366 = vrot.slane %v361, %v365
    %v384 = vunpack.c.l.b16 %v344
    %v385 = vunpack.c.l.b16 %v345
    %v386 = vunpack.c.l.b16 %v346
    %v387 = vunpack.c.l.b16 %v347
    %v388 = vunpack.c.l.b16 %v348
    %v389 = vunpack.c.l.b16 %v349
    %v390 = vunpack.c.l.b16 %v350
    %v391 = vunpack.c.l.b16 %v351
    %v392 = vunpack.c.l.b16 %v352
    %v393 = vunpack.c.l.b16 %v353
    %v394 = vunpack.c.l.b16 %v354
    %v395 = vunpack.c.l.b16 %v355
    %v396 = vunpack.c.l.b16 %v356
    %v397 = vunpack.c.l.b16 %v357
    %v398 = vunpack.c.l.b16 %v358
    %v399 = vunpack.c.l.b16 %v359
    %v400 = vpack.c.b16 %v385, %v384
    %v401 = vpack.c.b16 %v387, %v386
    %v402 = vpack.c.b16 %v389, %v388
    %v403 = vpack.c.b16 %v391, %v390
    %v404 = vpack.c.b16 %v393, %v392
    %v405 = vpack.c.b16 %v395, %v394
    %v406 = vpack.c.b16 %v397, %v396
    %v407 = vpack.c.b16 %v399, %v398
    %416 = vmatprep.subr.bf16.mxu0 0
    %417 = vmatpush1.bf16.msra.mxu0 %v407
    %418 = vmatprep.subr.bf16.mxu0 0
    %419 = vmatpush1.bf16.msra.mxu0 %v406
    %420 = vmatprep.subr.bf16.mxu0 0
    %421 = vmatpush1.bf16.msra.mxu0 %v405
    %422 = vmatprep.subr.bf16.mxu0 0
    %423 = vmatpush1.bf16.msra.mxu0 %v404
    %424 = vmatprep.subr.bf16.mxu0 0
    %425 = vmatpush1.bf16.msra.mxu0 %v403
    %426 = vmatprep.subr.bf16.mxu0 0
    %427 = vmatpush1.bf16.msra.mxu0 %v402
    %428 = vmatprep.subr.bf16.mxu0 0
    %429 = vmatpush1.bf16.msra.mxu0 %v401
    %430 = vmatprep.subr.bf16.mxu0 0
    %431 = vmatpush1.bf16.msra.mxu0 %v400
    %432 = vmatprep.subr.bf16.mxu0 0
    %433 = vmatpush2.bf16.msra.mxu0 0
    %434 = vmatprep.subr.bf16.mxu0 0
    %435 = vmatpush2.bf16.msra.mxu0 0
    %436 = vmatprep.subr.bf16.mxu0 0
    %437 = vmatpush2.bf16.msra.mxu0 0
    %438 = vmatprep.subr.bf16.mxu0 0
    %439 = vmatpush2.bf16.msra.mxu0 0
    %440 = vmatprep.subr.bf16.mxu0 0
    %441 = vmatpush2.bf16.msra.mxu0 0
    %442 = vmatprep.subr.bf16.mxu0 0
    %443 = vmatpush2.bf16.msra.mxu0 0
    %444 = vmatprep.subr.bf16.mxu0 0
    %445 = vmatpush2.bf16.msra.mxu0 0
    %446 = vmatprep.subr.bf16.mxu0 0
    %447 = vmatpush2.bf16.msra.mxu0 0
    %448 = vmatprep.mubr.bf16.mxu0 0
    %449 = vmatmul.mubr.bf16.gmra.mxu0 %v342
    %v450 = vpop.f32.mrf.mxu0
    %v451 = vadd.f32 %v366, %v450
    %v452 = vpop.f32.mrf.mxu0
    %v453 = vpop.f32.mrf.mxu0
    %v454 = vadd.f32 %v366, %v453
    %v455 = vpop.f32.mrf.mxu0
    %456 = vdwg.mxu0
    %v457 = vpack.c.bf16 %v454, %v451
    %v458 = vmul.bf16 %v457, 1036860877
    %v459 = vmax.bf16 %v457, %v458
    %s460 = scalar_lea.vmem [#allocation2], 256
    %v461 = vld [vmem:[%s460] sm:$0xf]
    %v462 = vld [vmem:[%s460 + $0x4] sm:$0xf]
    %v463 = vld [vmem:[%s460 + $0x8] sm:$0xf]
    %v464 = vld [vmem:[%s460 + $0xc] sm:$0xf]
    %v465 = vld [vmem:[%s460 + $0x10] sm:$0xf]
    %v466 = vld [vmem:[%s460 + $0x14] sm:$0xf]
    %v467 = vld [vmem:[%s460 + $0x18] sm:$0xf]
    %v468 = vld [vmem:[%s460 + $0x1c] sm:$0xf]
    %v469 = vld [vmem:[%s460 + $0x20] sm:$0xf]
    %v470 = vld [vmem:[%s460 + $0x24] sm:$0xf]
    %v471 = vld [vmem:[%s460 + $0x28] sm:$0xf]
    %v472 = vld [vmem:[%s460 + $0x2c] sm:$0xf]
    %v473 = vld [vmem:[%s460 + $0x30] sm:$0xf]
    %v474 = vld [vmem:[%s460 + $0x34] sm:$0xf]
    %v475 = vld [vmem:[%s460 + $0x38] sm:$0xf]
    %v476 = vld [vmem:[%s460 + $0x3c] sm:$0xf]
    %s477 = scalar_lea.vmem %s2, 4
    %v478 = vld [vmem:[%s477] sm:$0x1]
    %v480 = vlaneseq
    %v481 = vshrl.u32 %v480, 7
    %v482 = vsub.s32 0, %v481
    %v483 = vrot.slane %v478, %v482
    %v501 = vunpack.c.l.b16 %v461
    %v502 = vunpack.c.l.b16 %v462
    %v503 = vunpack.c.l.b16 %v463
    %v504 = vunpack.c.l.b16 %v464
    %v505 = vunpack.c.l.b16 %v465
    %v506 = vunpack.c.l.b16 %v466
    %v507 = vunpack.c.l.b16 %v467
    %v508 = vunpack.c.l.b16 %v468
    %v509 = vunpack.c.l.b16 %v469
    %v510 = vunpack.c.l.b16 %v470
    %v511 = vunpack.c.l.b16 %v471
    %v512 = vunpack.c.l.b16 %v472
    %v513 = vunpack.c.l.b16 %v473
    %v514 = vunpack.c.l.b16 %v474
    %v515 = vunpack.c.l.b16 %v475
    %v516 = vunpack.c.l.b16 %v476
    %v517 = vpack.c.b16 %v502, %v501
    %v518 = vpack.c.b16 %v504, %v503
    %v519 = vpack.c.b16 %v506, %v505
    %v520 = vpack.c.b16 %v508, %v507
    %v521 = vpack.c.b16 %v510, %v509
    %v522 = vpack.c.b16 %v512, %v511
    %v523 = vpack.c.b16 %v514, %v513
    %v524 = vpack.c.b16 %v516, %v515
    %533 = vmatprep.subr.bf16.mxu0 0
    %534 = vmatpush1.bf16.msra.mxu0 %v524
    %535 = vmatprep.subr.bf16.mxu0 0
    %536 = vmatpush1.bf16.msra.mxu0 %v523
    %537 = vmatprep.subr.bf16.mxu0 0
    %538 = vmatpush1.bf16.msra.mxu0 %v522
    %539 = vmatprep.subr.bf16.mxu0 0
    %540 = vmatpush1.bf16.msra.mxu0 %v521
    %541 = vmatprep.subr.bf16.mxu0 0
    %542 = vmatpush1.bf16.msra.mxu0 %v520
    %543 = vmatprep.subr.bf16.mxu0 0
    %544 = vmatpush1.bf16.msra.mxu0 %v519
    %545 = vmatprep.subr.bf16.mxu0 0
    %546 = vmatpush1.bf16.msra.mxu0 %v518
    %547 = vmatprep.subr.bf16.mxu0 0
    %548 = vmatpush1.bf16.msra.mxu0 %v517
    %549 = vmatprep.subr.bf16.mxu0 0
    %550 = vmatpush2.bf16.msra.mxu0 0
    %551 = vmatprep.subr.bf16.mxu0 0
    %552 = vmatpush2.bf16.msra.mxu0 0
    %553 = vmatprep.subr.bf16.mxu0 0
    %554 = vmatpush2.bf16.msra.mxu0 0
    %555 = vmatprep.subr.bf16.mxu0 0
    %556 = vmatpush2.bf16.msra.mxu0 0
    %557 = vmatprep.subr.bf16.mxu0 0
    %558 = vmatpush2.bf16.msra.mxu0 0
    %559 = vmatprep.subr.bf16.mxu0 0
    %560 = vmatpush2.bf16.msra.mxu0 0
    %561 = vmatprep.subr.bf16.mxu0 0
    %562 = vmatpush2.bf16.msra.mxu0 0
    %563 = vmatprep.subr.bf16.mxu0 0
    %564 = vmatpush2.bf16.msra.mxu0 0
    %565 = vmatprep.mubr.bf16.mxu0 0
    %566 = vmatmul.mubr.bf16.gmra.mxu0 %v459
    %v567 = vpop.f32.mrf.mxu0
    %v568 = vadd.f32 %v483, %v567
    %v569 = vpop.f32.mrf.mxu0
    %v570 = vpop.f32.mrf.mxu0
    %v571 = vadd.f32 %v483, %v570
    %v572 = vpop.f32.mrf.mxu0
    %573 = vdwg.mxu0
    %574 = vst.msk [vmem:[#allocation5] sm:$0xff] %vm61, %v568
    %575 = vst.msk [vmem:[#allocation5 + $0x8] sm:$0xff] %vm61, %v571
    // Predicated region
    $region18: #{_net_forward_impl.1} parent=1 // pred_check
      _
    $region19: #{_net_forward_impl.1} parent=1 // pred_check_branch
      %577 = sbr.rel (0) target = $region21
    $region20: #{_net_forward_impl.1} parent=1 // pred_region
      %s579 = ssub.s32 256, 256
      %580 = vsyncadd [#allocation4], %s579
      %s581 = sshll.u32 [#allocation5], 4
      %s582 = int_to_ptr.vmem [resolvable:$true] %s581
      %587 = dma.vmem_to_hbm [thread:$0]  %s582, 256, %s3, [#allocation4], 128, 128, 8
    $region21: #{_net_forward_impl.1} parent=1 // pred_fallthru
      _
    // Predicated region
    $region22: #{_net_forward_impl.1} parent=1 // pred_check
      _
    $region23: #{_net_forward_impl.1} parent=1 // pred_check_branch
      %589 = sbr.rel (0) target = $region25
    $region24: #{_net_forward_impl.1} parent=1 // pred_region
      %590 = dma.done [#allocation4], 256
    $region25: #{_net_forward_impl.1} parent=1 // pred_fallthru
      _
    %591 = vsyncpa [#allocation3], 1
    %592 = vsyncpa [#allocation4], 1

</llo_original>
